<compile_context>
chip_gen: v5e
topology: v5e:2x2
jax: 0.10.0
libtpu: 0.0.40
codegen_flags: <defaults>
</compile_context>

<pallas_src>
import functools

import jax
import jax.numpy as jnp
from jax.experimental import pallas as pl
from jax.experimental.pallas import tpu as pltpu

# Row layout of the packed (16, D) parameter-vector slab.
ROW_BQ, ROW_BK, ROW_BV, ROW_BO, ROW_G1, ROW_B1, ROW_BF, ROW_G2, ROW_B2 = range(9)
VEC_ROWS = 16  # padded to a sublane multiple of 8


def encoder_kernel(x_ref, wqkv_ref, wo_ref, wf_ref, vecs_ref, out_ref, *, num_heads):
    bt, S, D = x_ref.shape
    H = num_heads
    dh = D // H

    x = x_ref[...]                                   # (bt, S, D) f32
    x2d = x.reshape(bt * S, D)                       # merge leading dims (free)
    xb = x2d.astype(jnp.bfloat16)

    def vrow(r):                                     # (1, D) f32 row of the vector slab
        return vecs_ref[r:r + 1, :]

    # ---- QKV projections: three bf16 MXU matmuls, f32 accumulation -------------------
    # (only one D-wide f32 result live at a time; 1/sqrt(dh) already folded into
    #  wqkv_ref[0] and the bq row host-side)
    def proj(idx, bias_row):
        r = jnp.dot(xb, wqkv_ref[idx], preferred_element_type=jnp.float32) + vrow(bias_row)
        return r.astype(jnp.bfloat16).reshape(bt, S, D)

    qb = proj(0, ROW_BQ)
    kb = proj(1, ROW_BK)
    vb = proj(2, ROW_BV)

    # ---- per-head attention; WO folded into the head loop (dh < 128) -----------------
    # TODO(synk): for large S, tile the key axis with an online-softmax inner loop
    # instead of materializing the full (bt, S, S) score matrix per head.
    acc = jnp.zeros((bt * S, D), jnp.float32)
    for h in range(H):                               # H is small & static
        sl = slice(h * dh, (h + 1) * dh)
        s = jnp.einsum("bqd,bkd->bqk", qb[:, :, sl], kb[:, :, sl],
                       preferred_element_type=jnp.float32)              # (bt, S, S) f32
        s = s - jnp.max(s, axis=-1, keepdims=True)
        p = jnp.exp(s)
        p = p * pl.reciprocal(jnp.sum(p, axis=-1, keepdims=True), approx=True)
        ctx = jnp.einsum("bqk,bkd->bqd", p.astype(jnp.bfloat16), vb[:, :, sl],
                         preferred_element_type=jnp.float32)             # (bt, S, dh)
        acc = acc + jnp.dot(ctx.reshape(bt * S, dh).astype(jnp.bfloat16),
                            wo_ref[sl, :], preferred_element_type=jnp.float32)
    attn = acc + vrow(ROW_BO)                        # (bt*S, D) f32

    def layernorm(z, g, b):
        mean = jnp.mean(z, axis=-1, keepdims=True)
        diff = z - mean
        # torch.var default is unbiased (ddof=1); module uses eps=1e-12
        var = jnp.sum(diff * diff, axis=-1, keepdims=True) / (D - 1)
        return diff * g * jax.lax.rsqrt(var + 1e-12) + b

    # ---- residual + LN1 + FFN + residual + LN2 ----------------------------------------
    x1 = x2d + attn
    x1n = layernorm(x1, vrow(ROW_G1), vrow(ROW_B1))
    ffn = jnp.dot(x1n.astype(jnp.bfloat16), wf_ref[...],
                  preferred_element_type=jnp.float32) + vrow(ROW_BF)
    x2 = x1n + ffn
    y = layernorm(x2, vrow(ROW_G2), vrow(ROW_B2))
    out_ref[...] = y.reshape(bt, S, D)


def _vmem_config():
    """Per-generation (working-set budget, requested scoped vmem limit) in bytes."""
    try:
        kind = jax.devices()[0].device_kind.lower()
    except Exception:
        kind = ""
    if "v7" in kind:
        return 40 << 20, 48 << 20            # v7x: 64 MiB physical VMEM per TC
    if "v5" in kind or "v6" in kind:
        return 80 << 20, 100 << 20           # v5e/v6e: 128 MiB physical VMEM
    return 24 << 20, 32 << 20                # unknown generation: conservative


def _pick_batch_tile(B, S, D):
    """Largest divisor of B whose per-step working set fits the generation's VMEM
    budget, while keeping >= 2 grid steps whenever B >= 2 (so the 'parallel' batch
    axis can shard across v7x's two TensorCores)."""
    budget, vmem_limit = _vmem_config()
    # Fixed (weight) bytes, conservatively assumed double-buffered by the pipeline.
    fixed = 2 * (3 * D * D * 2 + D * D * 2 + D * D * 2 + VEC_ROWS * D * 4)
    # Per batch-element bytes: x/out f32 double-buffered, bf16 q/k/v, one head's
    # f32 scores+probs in flight, f32 accumulator + temp headroom.
    per_b = (2 * 2 * S * D * 4) + (3 * S * D * 2) + (2 * S * S * 4) + (6 * S * D * 4)

    bt = 1
    for cand in range(1, B + 1):
        if B % cand:
            continue
        if fixed + cand * per_b > budget:
            break                            # larger candidates only get bigger
        if cand * S > 4096:
            break                            # diminishing MXU-fill returns past ~4K rows
        if B >= 2 and B // cand < 2:
            continue                         # keep >= 2 grid steps for dual-TC v7x
        bt = cand
    return bt, vmem_limit


def transformers_encoder(x, params, num_heads):
    B, S, D = x.shape
    H = num_heads
    dh = D // H
    scale = float(dh) ** -0.5

    # ---- host-side packing -------------------------------------------------------------
    # Block-diagonal per-head projections -> (D, D). NOTE: this is H x the necessary
    # FLOPs/bytes; it is only kept because dh < 128 (it fills the MXU K dim). When
    # dh >= 128, switch to H-batched (dh, dh) projections instead.
    def block_diag(w):                        # (H, dh, dh) -> (D, D)
        out = jnp.zeros((D, D), jnp.float32)
        for h in range(H):
            out = out.at[h * dh:(h + 1) * dh, h * dh:(h + 1) * dh].set(w[h])
        return out

    wqkv = jnp.stack(
        [block_diag(params["wq"]) * scale,    # fold 1/sqrt(dh) into Q weight
         block_diag(params["wk"]),
         block_diag(params["wv"])], axis=0).astype(jnp.bfloat16)        # (3, D, D) bf16
    wo = params["wo"].astype(jnp.bfloat16)
    wf = params["wf"].astype(jnp.bfloat16)

    # All (1, D) parameter vectors packed into one (16, D) f32 slab (single DMA).
    rows = [
        params["bq"].reshape(1, D) * scale,   # fold 1/sqrt(dh) into q bias too
        params["bk"].reshape(1, D),
        params["bv"].reshape(1, D),
        params["bo"].reshape(1, D),
        params["g1"].reshape(1, D),
        params["b1"].reshape(1, D),
        params["bf"].reshape(1, D),
        params["g2"].reshape(1, D),
        params["b2"].reshape(1, D),
    ]
    vecs = jnp.concatenate(
        rows + [jnp.zeros((VEC_ROWS - len(rows), D), jnp.float32)], axis=0)   # (16, D)

    bt, vmem_limit = _pick_batch_tile(B, S, D)

    full = lambda shape: pl.BlockSpec(shape, lambda b: (0,) * len(shape))
    # TODO(synk): single-buffer the constant-index weight blocks (pipeline_mode=
    # pl.Buffered(1)) once verified the Mosaic version in use accepts it.

    cost = pl.CostEstimate(
        flops=int(2 * B * S * (5 * D * D + 2 * S * D)),
        transcendentals=int(B * H * S * S),
        bytes_accessed=int(2 * B * S * D * 4 + 5 * D * D * 2 + VEC_ROWS * D * 4),
    )

    kernel = pl.pallas_call(
        functools.partial(encoder_kernel, num_heads=H),
        out_shape=jax.ShapeDtypeStruct((B, S, D), jnp.float32),
        grid=(B // bt,),
        in_specs=[
            pl.BlockSpec((bt, S, D), lambda b: (b, 0, 0)),   # x
            full((3, D, D)),                                  # packed QKV weights (bf16)
            full((D, D)),                                     # wo (bf16)
            full((D, D)),                                     # wf (bf16)
            full((VEC_ROWS, D)),                              # packed bias/gain vectors (f32)
        ],
        out_specs=pl.BlockSpec((bt, S, D), lambda b: (b, 0, 0)),
        compiler_params=pltpu.CompilerParams(
            dimension_semantics=("parallel",),                # batch blocks independent
            vmem_limit_bytes=vmem_limit),
        cost_estimate=cost,
    )
    return kernel(x, wqkv, wo, wf, vecs)


def reference_encoder(x, params):
    """Pure-JAX f32 reference of the intended forward pass (for validation)."""
    B, S, D = x.shape
    H, dh, _ = params["wq"].shape
    heads = []
    for h in range(H):
        xh = x[..., h * dh:(h + 1) * dh]
        q = xh @ params["wq"][h] + params["bq"][h]
        k = xh @ params["wk"][h] + params["bk"][h]
        v = xh @ params["wv"][h] + params["bv"][h]
        s = jnp.einsum("bqd,bkd->bqk", q, k) / jnp.sqrt(jnp.float32(dh))
        p = jax.nn.softmax(s, axis=-1)
        heads.append(jnp.einsum("bqk,bkd->bqd", p, v))
    attn = jnp.concatenate(heads, axis=-1) @ params["wo"] + params["bo"]

    def ln(z, g, b):
        mean = jnp.mean(z, axis=-1, keepdims=True)
        var = jnp.sum((z - mean) ** 2, axis=-1, keepdims=True) / (D - 1)
        return (z - mean) * g / jnp.sqrt(var + 1e-12) + b

    x1 = ln(x + attn, params["g1"], params["b1"])
    x2 = ln(x1 + (x1 @ params["wf"] + params["bf"]), params["g2"], params["b2"])
    return x2


def make_params(key, num_heads, d_model):
    dh = d_model // num_heads
    ks = jax.random.split(key, 8)
    return {
        # per-head projection weights stored already transposed: out = x @ W + b
        "wq": 0.1 * jax.random.normal(ks[0], (num_heads, dh, dh), jnp.float32),
        "bq": 0.1 * jax.random.normal(ks[1], (num_heads, 1, dh), jnp.float32),
        "wk": 0.1 * jax.random.normal(ks[2], (num_heads, dh, dh), jnp.float32),
        "bk": 0.1 * jax.random.normal(ks[3], (num_heads, 1, dh), jnp.float32),
        "wv": 0.1 * jax.random.normal(ks[4], (num_heads, dh, dh), jnp.float32),
        "bv": 0.1 * jax.random.normal(ks[5], (num_heads, 1, dh), jnp.float32),
        "wo": 0.1 * jax.random.normal(ks[6], (d_model, d_model), jnp.float32),
        "bo": jnp.zeros((1, d_model), jnp.float32),
        "g1": jnp.ones((1, d_model), jnp.float32),
        "b1": jnp.zeros((1, d_model), jnp.float32),
        "wf": 0.1 * jax.random.normal(ks[7], (d_model, d_model), jnp.float32),
        "bf": jnp.zeros((1, d_model), jnp.float32),
        "g2": jnp.ones((1, d_model), jnp.float32),
        "b2": jnp.zeros((1, d_model), jnp.float32),
    }


if __name__ == "__main__":
    B, S, D, H = 2, 8, 32, 4          # batch, seq (= d_q), d_model, num_heads
    key = jax.random.PRNGKey(0)
    k_x, k_p = jax.random.split(key)
    x = jax.random.normal(k_x, (B, S, D), jnp.float32)
    params = make_params(k_p, H, D)

    out = transformers_encoder(x, params, H)
    out = jax.block_until_ready(out)

    ref = reference_encoder(x, params)
    assert out.shape == (B, S, D)
    # bf16 matmul operands (f32 accumulation) + approx reciprocal -> loosened tolerance.
    assert jnp.allclose(out, ref, rtol=3e-2, atol=3e-2), "mismatch vs JAX reference"
    print("KERNEL_OK")
</pallas_src>

<mosaic_0001>
module attributes {stable_mosaic.version = 11 : i64} {
  func.func @encoder_kernel(%arg0: i32, %arg1: memref<1x8x32xf32, #tpu.memory_space<vmem>>, %arg2: memref<3x32x32xbf16, #tpu.memory_space<vmem>>, %arg3: memref<32x32xbf16, #tpu.memory_space<vmem>>, %arg4: memref<32x32xbf16, #tpu.memory_space<vmem>>, %arg5: memref<16x32xf32, #tpu.memory_space<vmem>>, %arg6: memref<1x8x32xf32, #tpu.memory_space<vmem>>) attributes {dimension_semantics = [#tpu.dimension_semantics<parallel>], iteration_bounds = array<i64: 2>, scalar_prefetch = 0 : i64, scratch_operands = 0 : i64, tpu.core_type = #tpu.core_type<tc>, window_params = [{transform_indices = @transform_0, window_bounds = array<i64: 1, 8, 32>}, {pipeline_mode = #tpu.pipeline_mode<synchronous>, transform_indices = @transform_1, window_bounds = array<i64: 3, 32, 32>}, {pipeline_mode = #tpu.pipeline_mode<synchronous>, transform_indices = @transform_2, window_bounds = array<i64: 32, 32>}, {pipeline_mode = #tpu.pipeline_mode<synchronous>, transform_indices = @transform_3, window_bounds = array<i64: 32, 32>}, {pipeline_mode = #tpu.pipeline_mode<synchronous>, transform_indices = @transform_4, window_bounds = array<i64: 16, 32>}, {transform_indices = @transform_5, window_bounds = array<i64: 1, 8, 32>}]} {
    %c0 = arith.constant 0 : index
    %c0_0 = arith.constant 0 : index
    %c0_1 = arith.constant 0 : index
    %0 = vector.load %arg1[%c0, %c0_0, %c0_1] : memref<1x8x32xf32, #tpu.memory_space<vmem>>, vector<1x8x32xf32>
    %1 = vector.shape_cast %0 : vector<1x8x32xf32> to vector<8x32xf32>
    %2 = arith.truncf %1 : vector<8x32xf32> to vector<8x32xbf16>
    %c0_2 = arith.constant 0 : index
    %c0_3 = arith.constant 0 : index
    %c0_4 = arith.constant 0 : index
    %3 = vector.load %arg2[%c0_2, %c0_3, %c0_4] : memref<3x32x32xbf16, #tpu.memory_space<vmem>>, vector<1x32x32xbf16>
    %4 = vector.shape_cast %3 : vector<1x32x32xbf16> to vector<32x32xbf16>
    %cst = arith.constant dense<0.000000e+00> : vector<8x32xf32>
    %5 = tpu.matmul %2, %4, %cst {dimension_numbers = #tpu.dot_dimension_numbers<[1], [0], [0], [1], [0, 0, 1, 1], [], []>} : vector<8x32xbf16>, vector<32x32xbf16>, vector<8x32xf32> -> vector<8x32xf32>
    %c0_5 = arith.constant 0 : index
    %c0_6 = arith.constant 0 : index
    %6 = vector.load %arg5[%c0_5, %c0_6] : memref<16x32xf32, #tpu.memory_space<vmem>>, vector<1x32xf32>
    %7 = vector.broadcast %6 : vector<1x32xf32> to vector<8x32xf32>
    %8 = arith.addf %5, %7 : vector<8x32xf32>
    %9 = arith.truncf %8 : vector<8x32xf32> to vector<8x32xbf16>
    %10 = vector.shape_cast %9 : vector<8x32xbf16> to vector<1x8x32xbf16>
    %c1 = arith.constant 1 : index
    %c0_7 = arith.constant 0 : index
    %c0_8 = arith.constant 0 : index
    %11 = vector.load %arg2[%c1, %c0_7, %c0_8] : memref<3x32x32xbf16, #tpu.memory_space<vmem>>, vector<1x32x32xbf16>
    %12 = vector.shape_cast %11 : vector<1x32x32xbf16> to vector<32x32xbf16>
    %cst_9 = arith.constant dense<0.000000e+00> : vector<8x32xf32>
    %13 = tpu.matmul %2, %12, %cst_9 {dimension_numbers = #tpu.dot_dimension_numbers<[1], [0], [0], [1], [0, 0, 1, 1], [], []>} : vector<8x32xbf16>, vector<32x32xbf16>, vector<8x32xf32> -> vector<8x32xf32>
    %c1_10 = arith.constant 1 : index
    %c0_11 = arith.constant 0 : index
    %14 = vector.load %arg5[%c1_10, %c0_11] : memref<16x32xf32, #tpu.memory_space<vmem>>, vector<1x32xf32>
    %15 = vector.broadcast %14 : vector<1x32xf32> to vector<8x32xf32>
    %16 = arith.addf %13, %15 : vector<8x32xf32>
    %17 = arith.truncf %16 : vector<8x32xf32> to vector<8x32xbf16>
    %18 = vector.shape_cast %17 : vector<8x32xbf16> to vector<1x8x32xbf16>
    %c2 = arith.constant 2 : index
    %c0_12 = arith.constant 0 : index
    %c0_13 = arith.constant 0 : index
    %19 = vector.load %arg2[%c2, %c0_12, %c0_13] : memref<3x32x32xbf16, #tpu.memory_space<vmem>>, vector<1x32x32xbf16>
    %20 = vector.shape_cast %19 : vector<1x32x32xbf16> to vector<32x32xbf16>
    %cst_14 = arith.constant dense<0.000000e+00> : vector<8x32xf32>
    %21 = tpu.matmul %2, %20, %cst_14 {dimension_numbers = #tpu.dot_dimension_numbers<[1], [0], [0], [1], [0, 0, 1, 1], [], []>} : vector<8x32xbf16>, vector<32x32xbf16>, vector<8x32xf32> -> vector<8x32xf32>
    %c2_15 = arith.constant 2 : index
    %c0_16 = arith.constant 0 : index
    %22 = vector.load %arg5[%c2_15, %c0_16] : memref<16x32xf32, #tpu.memory_space<vmem>>, vector<1x32xf32>
    %23 = vector.broadcast %22 : vector<1x32xf32> to vector<8x32xf32>
    %24 = arith.addf %21, %23 : vector<8x32xf32>
    %25 = arith.truncf %24 : vector<8x32xf32> to vector<8x32xbf16>
    %26 = vector.shape_cast %25 : vector<8x32xbf16> to vector<1x8x32xbf16>
    %cst_17 = arith.constant 0.000000e+00 : f32
    %27 = vector.broadcast %cst_17 : f32 to vector<8x32xf32>
    %28 = vector.extract_strided_slice %10 {offsets = [0, 0, 0], sizes = [1, 8, 8], strides = [1, 1, 1]} : vector<1x8x32xbf16> to vector<1x8x8xbf16>
    %29 = vector.extract_strided_slice %18 {offsets = [0, 0, 0], sizes = [1, 8, 8], strides = [1, 1, 1]} : vector<1x8x32xbf16> to vector<1x8x8xbf16>
    "tpu.trace_start"() <{level = 10 : i32, message = "bqd,bkd->bqk"}> : () -> ()
    %cst_18 = arith.constant dense<0.000000e+00> : vector<1x8x8xf32>
    %30 = tpu.matmul %28, %29, %cst_18 {dimension_numbers = #tpu.dot_dimension_numbers<[2], [2], [1], [1], [0, 0, 0, 1, 1, 1], [0], [0]>} : vector<1x8x8xbf16>, vector<1x8x8xbf16>, vector<1x8x8xf32> -> vector<1x8x8xf32>
    "tpu.trace_stop"() : () -> ()
    %cst_19 = arith.constant dense<0xFF800000> : vector<1x8xf32>
    %31 = vector.multi_reduction <maximumf>, %30, %cst_19 [2] : vector<1x8x8xf32> to vector<1x8xf32>
    %32 = vector.shape_cast %31 : vector<1x8xf32> to vector<1x8x1xf32>
    %33 = vector.broadcast %32 : vector<1x8x1xf32> to vector<1x8x8xf32>
    %34 = arith.subf %30, %33 : vector<1x8x8xf32>
    %35 = math.exp %34 : vector<1x8x8xf32>
    %cst_20 = arith.constant dense<0.000000e+00> : vector<1x8xf32>
    %36 = vector.multi_reduction <add>, %35, %cst_20 [2] : vector<1x8x8xf32> to vector<1x8xf32>
    %37 = vector.shape_cast %36 : vector<1x8xf32> to vector<1x8x1xf32>
    %38 = tpu.reciprocal %37 {approx = true} : vector<1x8x1xf32> -> vector<1x8x1xf32>
    %39 = vector.broadcast %38 : vector<1x8x1xf32> to vector<1x8x8xf32>
    %40 = arith.mulf %35, %39 : vector<1x8x8xf32>
    %41 = arith.truncf %40 : vector<1x8x8xf32> to vector<1x8x8xbf16>
    %42 = vector.extract_strided_slice %26 {offsets = [0, 0, 0], sizes = [1, 8, 8], strides = [1, 1, 1]} : vector<1x8x32xbf16> to vector<1x8x8xbf16>
    "tpu.trace_start"() <{level = 10 : i32, message = "bqk,bkd->bqd"}> : () -> ()
    %cst_21 = arith.constant dense<0.000000e+00> : vector<1x8x8xf32>
    %43 = tpu.matmul %41, %42, %cst_21 {dimension_numbers = #tpu.dot_dimension_numbers<[2], [1], [1], [2], [0, 0, 0, 1, 1, 2], [0], [0]>} : vector<1x8x8xbf16>, vector<1x8x8xbf16>, vector<1x8x8xf32> -> vector<1x8x8xf32>
    "tpu.trace_stop"() : () -> ()
    %44 = vector.shape_cast %43 : vector<1x8x8xf32> to vector<8x8xf32>
    %45 = arith.truncf %44 : vector<8x8xf32> to vector<8x8xbf16>
    %c0_22 = arith.constant 0 : index
    %c0_23 = arith.constant 0 : index
    %46 = vector.load %arg3[%c0_22, %c0_23] : memref<32x32xbf16, #tpu.memory_space<vmem>>, vector<8x32xbf16>
    %cst_24 = arith.constant dense<0.000000e+00> : vector<8x32xf32>
    %47 = tpu.matmul %45, %46, %cst_24 {dimension_numbers = #tpu.dot_dimension_numbers<[1], [0], [0], [1], [0, 0, 1, 1], [], []>} : vector<8x8xbf16>, vector<8x32xbf16>, vector<8x32xf32> -> vector<8x32xf32>
    %48 = arith.addf %27, %47 : vector<8x32xf32>
    %49 = vector.extract_strided_slice %10 {offsets = [0, 0, 8], sizes = [1, 8, 8], strides = [1, 1, 1]} : vector<1x8x32xbf16> to vector<1x8x8xbf16>
    %50 = vector.extract_strided_slice %18 {offsets = [0, 0, 8], sizes = [1, 8, 8], strides = [1, 1, 1]} : vector<1x8x32xbf16> to vector<1x8x8xbf16>
    "tpu.trace_start"() <{level = 10 : i32, message = "bqd,bkd->bqk"}> : () -> ()
    %cst_25 = arith.constant dense<0.000000e+00> : vector<1x8x8xf32>
    %51 = tpu.matmul %49, %50, %cst_25 {dimension_numbers = #tpu.dot_dimension_numbers<[2], [2], [1], [1], [0, 0, 0, 1, 1, 1], [0], [0]>} : vector<1x8x8xbf16>, vector<1x8x8xbf16>, vector<1x8x8xf32> -> vector<1x8x8xf32>
    "tpu.trace_stop"() : () -> ()
    %cst_26 = arith.constant dense<0xFF800000> : vector<1x8xf32>
    %52 = vector.multi_reduction <maximumf>, %51, %cst_26 [2] : vector<1x8x8xf32> to vector<1x8xf32>
    %53 = vector.shape_cast %52 : vector<1x8xf32> to vector<1x8x1xf32>
    %54 = vector.broadcast %53 : vector<1x8x1xf32> to vector<1x8x8xf32>
    %55 = arith.subf %51, %54 : vector<1x8x8xf32>
    %56 = math.exp %55 : vector<1x8x8xf32>
    %cst_27 = arith.constant dense<0.000000e+00> : vector<1x8xf32>
    %57 = vector.multi_reduction <add>, %56, %cst_27 [2] : vector<1x8x8xf32> to vector<1x8xf32>
    %58 = vector.shape_cast %57 : vector<1x8xf32> to vector<1x8x1xf32>
    %59 = tpu.reciprocal %58 {approx = true} : vector<1x8x1xf32> -> vector<1x8x1xf32>
    %60 = vector.broadcast %59 : vector<1x8x1xf32> to vector<1x8x8xf32>
    %61 = arith.mulf %56, %60 : vector<1x8x8xf32>
    %62 = arith.truncf %61 : vector<1x8x8xf32> to vector<1x8x8xbf16>
    %63 = vector.extract_strided_slice %26 {offsets = [0, 0, 8], sizes = [1, 8, 8], strides = [1, 1, 1]} : vector<1x8x32xbf16> to vector<1x8x8xbf16>
    "tpu.trace_start"() <{level = 10 : i32, message = "bqk,bkd->bqd"}> : () -> ()
    %cst_28 = arith.constant dense<0.000000e+00> : vector<1x8x8xf32>
    %64 = tpu.matmul %62, %63, %cst_28 {dimension_numbers = #tpu.dot_dimension_numbers<[2], [1], [1], [2], [0, 0, 0, 1, 1, 2], [0], [0]>} : vector<1x8x8xbf16>, vector<1x8x8xbf16>, vector<1x8x8xf32> -> vector<1x8x8xf32>
    "tpu.trace_stop"() : () -> ()
    %65 = vector.shape_cast %64 : vector<1x8x8xf32> to vector<8x8xf32>
    %66 = arith.truncf %65 : vector<8x8xf32> to vector<8x8xbf16>
    %c8 = arith.constant 8 : index
    %c0_29 = arith.constant 0 : index
    %67 = vector.load %arg3[%c8, %c0_29] : memref<32x32xbf16, #tpu.memory_space<vmem>>, vector<8x32xbf16>
    %cst_30 = arith.constant dense<0.000000e+00> : vector<8x32xf32>
    %68 = tpu.matmul %66, %67, %cst_30 {dimension_numbers = #tpu.dot_dimension_numbers<[1], [0], [0], [1], [0, 0, 1, 1], [], []>} : vector<8x8xbf16>, vector<8x32xbf16>, vector<8x32xf32> -> vector<8x32xf32>
    %69 = arith.addf %48, %68 : vector<8x32xf32>
    %70 = vector.extract_strided_slice %10 {offsets = [0, 0, 16], sizes = [1, 8, 8], strides = [1, 1, 1]} : vector<1x8x32xbf16> to vector<1x8x8xbf16>
    %71 = vector.extract_strided_slice %18 {offsets = [0, 0, 16], sizes = [1, 8, 8], strides = [1, 1, 1]} : vector<1x8x32xbf16> to vector<1x8x8xbf16>
    "tpu.trace_start"() <{level = 10 : i32, message = "bqd,bkd->bqk"}> : () -> ()
    %cst_31 = arith.constant dense<0.000000e+00> : vector<1x8x8xf32>
    %72 = tpu.matmul %70, %71, %cst_31 {dimension_numbers = #tpu.dot_dimension_numbers<[2], [2], [1], [1], [0, 0, 0, 1, 1, 1], [0], [0]>} : vector<1x8x8xbf16>, vector<1x8x8xbf16>, vector<1x8x8xf32> -> vector<1x8x8xf32>
    "tpu.trace_stop"() : () -> ()
    %cst_32 = arith.constant dense<0xFF800000> : vector<1x8xf32>
    %73 = vector.multi_reduction <maximumf>, %72, %cst_32 [2] : vector<1x8x8xf32> to vector<1x8xf32>
    %74 = vector.shape_cast %73 : vector<1x8xf32> to vector<1x8x1xf32>
    %75 = vector.broadcast %74 : vector<1x8x1xf32> to vector<1x8x8xf32>
    %76 = arith.subf %72, %75 : vector<1x8x8xf32>
    %77 = math.exp %76 : vector<1x8x8xf32>
    %cst_33 = arith.constant dense<0.000000e+00> : vector<1x8xf32>
    %78 = vector.multi_reduction <add>, %77, %cst_33 [2] : vector<1x8x8xf32> to vector<1x8xf32>
    %79 = vector.shape_cast %78 : vector<1x8xf32> to vector<1x8x1xf32>
    %80 = tpu.reciprocal %79 {approx = true} : vector<1x8x1xf32> -> vector<1x8x1xf32>
    %81 = vector.broadcast %80 : vector<1x8x1xf32> to vector<1x8x8xf32>
    %82 = arith.mulf %77, %81 : vector<1x8x8xf32>
    %83 = arith.truncf %82 : vector<1x8x8xf32> to vector<1x8x8xbf16>
    %84 = vector.extract_strided_slice %26 {offsets = [0, 0, 16], sizes = [1, 8, 8], strides = [1, 1, 1]} : vector<1x8x32xbf16> to vector<1x8x8xbf16>
    "tpu.trace_start"() <{level = 10 : i32, message = "bqk,bkd->bqd"}> : () -> ()
    %cst_34 = arith.constant dense<0.000000e+00> : vector<1x8x8xf32>
    %85 = tpu.matmul %83, %84, %cst_34 {dimension_numbers = #tpu.dot_dimension_numbers<[2], [1], [1], [2], [0, 0, 0, 1, 1, 2], [0], [0]>} : vector<1x8x8xbf16>, vector<1x8x8xbf16>, vector<1x8x8xf32> -> vector<1x8x8xf32>
    "tpu.trace_stop"() : () -> ()
    %86 = vector.shape_cast %85 : vector<1x8x8xf32> to vector<8x8xf32>
    %87 = arith.truncf %86 : vector<8x8xf32> to vector<8x8xbf16>
    %c16 = arith.constant 16 : index
    %c0_35 = arith.constant 0 : index
    %88 = vector.load %arg3[%c16, %c0_35] : memref<32x32xbf16, #tpu.memory_space<vmem>>, vector<8x32xbf16>
    %cst_36 = arith.constant dense<0.000000e+00> : vector<8x32xf32>
    %89 = tpu.matmul %87, %88, %cst_36 {dimension_numbers = #tpu.dot_dimension_numbers<[1], [0], [0], [1], [0, 0, 1, 1], [], []>} : vector<8x8xbf16>, vector<8x32xbf16>, vector<8x32xf32> -> vector<8x32xf32>
    %90 = arith.addf %69, %89 : vector<8x32xf32>
    %91 = vector.extract_strided_slice %10 {offsets = [0, 0, 24], sizes = [1, 8, 8], strides = [1, 1, 1]} : vector<1x8x32xbf16> to vector<1x8x8xbf16>
    %92 = vector.extract_strided_slice %18 {offsets = [0, 0, 24], sizes = [1, 8, 8], strides = [1, 1, 1]} : vector<1x8x32xbf16> to vector<1x8x8xbf16>
    "tpu.trace_start"() <{level = 10 : i32, message = "bqd,bkd->bqk"}> : () -> ()
    %cst_37 = arith.constant dense<0.000000e+00> : vector<1x8x8xf32>
    %93 = tpu.matmul %91, %92, %cst_37 {dimension_numbers = #tpu.dot_dimension_numbers<[2], [2], [1], [1], [0, 0, 0, 1, 1, 1], [0], [0]>} : vector<1x8x8xbf16>, vector<1x8x8xbf16>, vector<1x8x8xf32> -> vector<1x8x8xf32>
    "tpu.trace_stop"() : () -> ()
    %cst_38 = arith.constant dense<0xFF800000> : vector<1x8xf32>
    %94 = vector.multi_reduction <maximumf>, %93, %cst_38 [2] : vector<1x8x8xf32> to vector<1x8xf32>
    %95 = vector.shape_cast %94 : vector<1x8xf32> to vector<1x8x1xf32>
    %96 = vector.broadcast %95 : vector<1x8x1xf32> to vector<1x8x8xf32>
    %97 = arith.subf %93, %96 : vector<1x8x8xf32>
    %98 = math.exp %97 : vector<1x8x8xf32>
    %cst_39 = arith.constant dense<0.000000e+00> : vector<1x8xf32>
    %99 = vector.multi_reduction <add>, %98, %cst_39 [2] : vector<1x8x8xf32> to vector<1x8xf32>
    %100 = vector.shape_cast %99 : vector<1x8xf32> to vector<1x8x1xf32>
    %101 = tpu.reciprocal %100 {approx = true} : vector<1x8x1xf32> -> vector<1x8x1xf32>
    %102 = vector.broadcast %101 : vector<1x8x1xf32> to vector<1x8x8xf32>
    %103 = arith.mulf %98, %102 : vector<1x8x8xf32>
    %104 = arith.truncf %103 : vector<1x8x8xf32> to vector<1x8x8xbf16>
    %105 = vector.extract_strided_slice %26 {offsets = [0, 0, 24], sizes = [1, 8, 8], strides = [1, 1, 1]} : vector<1x8x32xbf16> to vector<1x8x8xbf16>
    "tpu.trace_start"() <{level = 10 : i32, message = "bqk,bkd->bqd"}> : () -> ()
    %cst_40 = arith.constant dense<0.000000e+00> : vector<1x8x8xf32>
    %106 = tpu.matmul %104, %105, %cst_40 {dimension_numbers = #tpu.dot_dimension_numbers<[2], [1], [1], [2], [0, 0, 0, 1, 1, 2], [0], [0]>} : vector<1x8x8xbf16>, vector<1x8x8xbf16>, vector<1x8x8xf32> -> vector<1x8x8xf32>
    "tpu.trace_stop"() : () -> ()
    %107 = vector.shape_cast %106 : vector<1x8x8xf32> to vector<8x8xf32>
    %108 = arith.truncf %107 : vector<8x8xf32> to vector<8x8xbf16>
    %c24 = arith.constant 24 : index
    %c0_41 = arith.constant 0 : index
    %109 = vector.load %arg3[%c24, %c0_41] : memref<32x32xbf16, #tpu.memory_space<vmem>>, vector<8x32xbf16>
    %cst_42 = arith.constant dense<0.000000e+00> : vector<8x32xf32>
    %110 = tpu.matmul %108, %109, %cst_42 {dimension_numbers = #tpu.dot_dimension_numbers<[1], [0], [0], [1], [0, 0, 1, 1], [], []>} : vector<8x8xbf16>, vector<8x32xbf16>, vector<8x32xf32> -> vector<8x32xf32>
    %111 = arith.addf %90, %110 : vector<8x32xf32>
    %c3 = arith.constant 3 : index
    %c0_43 = arith.constant 0 : index
    %112 = vector.load %arg5[%c3, %c0_43] : memref<16x32xf32, #tpu.memory_space<vmem>>, vector<1x32xf32>
    %113 = vector.broadcast %112 : vector<1x32xf32> to vector<8x32xf32>
    %114 = arith.addf %111, %113 : vector<8x32xf32>
    %115 = arith.addf %1, %114 : vector<8x32xf32>
    %c4 = arith.constant 4 : index
    %c0_44 = arith.constant 0 : index
    %116 = vector.load %arg5[%c4, %c0_44] : memref<16x32xf32, #tpu.memory_space<vmem>>, vector<1x32xf32>
    %c5 = arith.constant 5 : index
    %c0_45 = arith.constant 0 : index
    %117 = vector.load %arg5[%c5, %c0_45] : memref<16x32xf32, #tpu.memory_space<vmem>>, vector<1x32xf32>
    %cst_46 = arith.constant dense<0.000000e+00> : vector<8xf32>
    %118 = vector.multi_reduction <add>, %115, %cst_46 [1] : vector<8x32xf32> to vector<8xf32>
    %119 = vector.shape_cast %118 : vector<8xf32> to vector<8x1xf32>
    %cst_47 = arith.constant 3.200000e+01 : f32
    %120 = vector.broadcast %cst_47 : f32 to vector<8x1xf32>
    %121 = arith.divf %119, %120 : vector<8x1xf32>
    %122 = vector.broadcast %121 : vector<8x1xf32> to vector<8x32xf32>
    %123 = arith.subf %115, %122 : vector<8x32xf32>
    %124 = arith.mulf %123, %123 : vector<8x32xf32>
    %cst_48 = arith.constant dense<0.000000e+00> : vector<8xf32>
    %125 = vector.multi_reduction <add>, %124, %cst_48 [1] : vector<8x32xf32> to vector<8xf32>
    %126 = vector.shape_cast %125 : vector<8xf32> to vector<8x1xf32>
    %cst_49 = arith.constant 3.100000e+01 : f32
    %127 = vector.broadcast %cst_49 : f32 to vector<8x1xf32>
    %128 = arith.divf %126, %127 : vector<8x1xf32>
    %129 = vector.broadcast %116 : vector<1x32xf32> to vector<8x32xf32>
    %130 = arith.mulf %123, %129 : vector<8x32xf32>
    %cst_50 = arith.constant 9.99999996E-13 : f32
    %131 = vector.broadcast %cst_50 : f32 to vector<8x1xf32>
    %132 = arith.addf %128, %131 : vector<8x1xf32>
    %133 = math.rsqrt %132 : vector<8x1xf32>
    %134 = vector.broadcast %133 : vector<8x1xf32> to vector<8x32xf32>
    %135 = arith.mulf %130, %134 : vector<8x32xf32>
    %136 = vector.broadcast %117 : vector<1x32xf32> to vector<8x32xf32>
    %137 = arith.addf %135, %136 : vector<8x32xf32>
    %138 = arith.truncf %137 : vector<8x32xf32> to vector<8x32xbf16>
    %c0_51 = arith.constant 0 : index
    %c0_52 = arith.constant 0 : index
    %139 = vector.load %arg4[%c0_51, %c0_52] : memref<32x32xbf16, #tpu.memory_space<vmem>>, vector<32x32xbf16>
    %cst_53 = arith.constant dense<0.000000e+00> : vector<8x32xf32>
    %140 = tpu.matmul %138, %139, %cst_53 {dimension_numbers = #tpu.dot_dimension_numbers<[1], [0], [0], [1], [0, 0, 1, 1], [], []>} : vector<8x32xbf16>, vector<32x32xbf16>, vector<8x32xf32> -> vector<8x32xf32>
    %c6 = arith.constant 6 : index
    %c0_54 = arith.constant 0 : index
    %141 = vector.load %arg5[%c6, %c0_54] : memref<16x32xf32, #tpu.memory_space<vmem>>, vector<1x32xf32>
    %142 = vector.broadcast %141 : vector<1x32xf32> to vector<8x32xf32>
    %143 = arith.addf %140, %142 : vector<8x32xf32>
    %144 = arith.addf %137, %143 : vector<8x32xf32>
    %c7 = arith.constant 7 : index
    %c0_55 = arith.constant 0 : index
    %145 = vector.load %arg5[%c7, %c0_55] : memref<16x32xf32, #tpu.memory_space<vmem>>, vector<1x32xf32>
    %c8_56 = arith.constant 8 : index
    %c0_57 = arith.constant 0 : index
    %146 = vector.load %arg5[%c8_56, %c0_57] : memref<16x32xf32, #tpu.memory_space<vmem>>, vector<1x32xf32>
    %cst_58 = arith.constant dense<0.000000e+00> : vector<8xf32>
    %147 = vector.multi_reduction <add>, %144, %cst_58 [1] : vector<8x32xf32> to vector<8xf32>
    %148 = vector.shape_cast %147 : vector<8xf32> to vector<8x1xf32>
    %cst_59 = arith.constant 3.200000e+01 : f32
    %149 = vector.broadcast %cst_59 : f32 to vector<8x1xf32>
    %150 = arith.divf %148, %149 : vector<8x1xf32>
    %151 = vector.broadcast %150 : vector<8x1xf32> to vector<8x32xf32>
    %152 = arith.subf %144, %151 : vector<8x32xf32>
    %153 = arith.mulf %152, %152 : vector<8x32xf32>
    %cst_60 = arith.constant dense<0.000000e+00> : vector<8xf32>
    %154 = vector.multi_reduction <add>, %153, %cst_60 [1] : vector<8x32xf32> to vector<8xf32>
    %155 = vector.shape_cast %154 : vector<8xf32> to vector<8x1xf32>
    %cst_61 = arith.constant 3.100000e+01 : f32
    %156 = vector.broadcast %cst_61 : f32 to vector<8x1xf32>
    %157 = arith.divf %155, %156 : vector<8x1xf32>
    %158 = vector.broadcast %145 : vector<1x32xf32> to vector<8x32xf32>
    %159 = arith.mulf %152, %158 : vector<8x32xf32>
    %cst_62 = arith.constant 9.99999996E-13 : f32
    %160 = vector.broadcast %cst_62 : f32 to vector<8x1xf32>
    %161 = arith.addf %157, %160 : vector<8x1xf32>
    %162 = math.rsqrt %161 : vector<8x1xf32>
    %163 = vector.broadcast %162 : vector<8x1xf32> to vector<8x32xf32>
    %164 = arith.mulf %159, %163 : vector<8x32xf32>
    %165 = vector.broadcast %146 : vector<1x32xf32> to vector<8x32xf32>
    %166 = arith.addf %164, %165 : vector<8x32xf32>
    %167 = vector.shape_cast %166 : vector<8x32xf32> to vector<1x8x32xf32>
    %c0_63 = arith.constant 0 : index
    %c0_64 = arith.constant 0 : index
    %c0_65 = arith.constant 0 : index
    %168 = vector.load %arg6[%c0_63, %c0_64, %c0_65] : memref<1x8x32xf32, #tpu.memory_space<vmem>>, vector<1x8x32xf32>
    tpu.vector_store %arg6[%c0_63, %c0_64, %c0_65], %167 {strides = array<i32>} : memref<1x8x32xf32, #tpu.memory_space<vmem>>, vector<1x8x32xf32>,
    return
  }
  func.func @transform_0(%arg0: i32) -> (i32, i32, i32) {
    %c0_i32 = arith.constant 0 : i32
    %c0_i32_0 = arith.constant 0 : i32
    %c0_i32_1 = arith.constant 0 : i32
    return %arg0, %c0_i32, %c0_i32_0 : i32, i32, i32
  }
  func.func @transform_1(%arg0: i32) -> (i32, i32, i32) {
    %c0_i32 = arith.constant 0 : i32
    %c0_i32_0 = arith.constant 0 : i32
    %c0_i32_1 = arith.constant 0 : i32
    %c0_i32_2 = arith.constant 0 : i32
    return %c0_i32, %c0_i32_0, %c0_i32_1 : i32, i32, i32
  }
  func.func @transform_2(%arg0: i32) -> (i32, i32) {
    %c0_i32 = arith.constant 0 : i32
    %c0_i32_0 = arith.constant 0 : i32
    %c0_i32_1 = arith.constant 0 : i32
    return %c0_i32, %c0_i32_0 : i32, i32
  }
  func.func @transform_3(%arg0: i32) -> (i32, i32) {
    %c0_i32 = arith.constant 0 : i32
    %c0_i32_0 = arith.constant 0 : i32
    %c0_i32_1 = arith.constant 0 : i32
    return %c0_i32, %c0_i32_0 : i32, i32
  }
  func.func @transform_4(%arg0: i32) -> (i32, i32) {
    %c0_i32 = arith.constant 0 : i32
    %c0_i32_0 = arith.constant 0 : i32
    %c0_i32_1 = arith.constant 0 : i32
    return %c0_i32, %c0_i32_0 : i32, i32
  }
  func.func @transform_5(%arg0: i32) -> (i32, i32, i32) {
    %c0_i32 = arith.constant 0 : i32
    %c0_i32_0 = arith.constant 0 : i32
    %c0_i32_1 = arith.constant 0 : i32
    return %arg0, %c0_i32, %c0_i32_0 : i32, i32, i32
  }
}

</mosaic_0001>

<llo_original>
// kernel: tpu_custom_call.1
$region0: #{tpu_custom_call.1}
  #allocation0 [shape = 'u32[]', space=smem, size = 0x4, offset = 0x4, fixed_abs, tag = 'smem constant byte address 0x4 - core index']
  #allocation1 [shape = 'u32[72,128]{1,0:T(1,128)}', space=vmem, size = 0x9000, scoped, tag = 'internal scratch']
  %s0 = inlined_call_operand.hbm [shape: f32[2,8,32], index: 0, kind: input, shape index: {}]
  %s1 = inlined_call_operand.hbm [shape: bf16[3,32,32], index: 1, kind: input, shape index: {}]
  %s2 = inlined_call_operand.hbm [shape: bf16[32,32], index: 2, kind: input, shape index: {}]
  %s3 = inlined_call_operand.hbm [shape: bf16[32,32], index: 3, kind: input, shape index: {}]
  %s4 = inlined_call_operand.hbm [shape: f32[16,32], index: 4, kind: input, shape index: {}]
  %s5 = inlined_call_operand.hbm [shape: f32[2,8,32], index: 5, kind: output, shape index: {}]
  %s6 = sld [smem:[#allocation0]]
  $region73: #{tpu_custom_call.1} parent=0
    _
  %s8 = ssub.s32 1, %s6
  %s9 = scalar_select 0, %s8, %s6
  $region1: #{tpu_custom_call.1} parent=0
    #allocation2 [shape = 'u8[8192]{0}', space=vmem, size = 0x2000, scoped, tag = 'input window, operand 0']
    #allocation3 [shape = 's32[2]{0}', space=sflag, size = 0x8, scoped, tag = 'scoped memory for tpu_custom_call.1']
    #allocation4 [shape = 's32[2]{0}', space=sflag, size = 0x8, scoped, tag = 'scoped memory for tpu_custom_call.1']
    #allocation5 [shape = 'u8[24576]{0}', space=vmem, size = 0x6000, scoped, tag = 'input window, operand 1, single buffered']
    #allocation6 [shape = 's32[1]{0}', space=sflag, size = 0x4, scoped, tag = 'scoped memory for tpu_custom_call.1']
    #allocation7 [shape = 'u8[8192]{0}', space=vmem, size = 0x2000, scoped, tag = 'input window, operand 2, single buffered']
    #allocation8 [shape = 'u8[8192]{0}', space=vmem, size = 0x2000, scoped, tag = 'input window, operand 3, single buffered']
    #allocation9 [shape = 's32[1]{0}', space=sflag, size = 0x4, scoped, tag = 'scoped memory for tpu_custom_call.1']
    #allocation10 [shape = 'u8[8192]{0}', space=vmem, size = 0x2000, scoped, tag = 'input window, operand 4, single buffered']
    #allocation11 [shape = 'u8[8192]{0}', space=vmem, size = 0x2000, scoped, tag = 'output window, operand 0']
    %10 = vsyncpa [#allocation3], 0
    %s11 = scalar_lea.sflag [#allocation3], 1
    %12 = vsyncpa %s11, 0
    %13 = vsyncpa [#allocation6], 0
    %14 = vsyncpa [#allocation9], 0
    %15 = vsyncpa [#allocation4], 0
    %s16 = scalar_lea.sflag [#allocation4], 1
    %17 = vsyncpa %s16, 0
    loop: start=0, step=1, limit=4
    $region2: #{tpu_custom_call.1} parent=1 // loop_pre_header
      _
    $region3: #{tpu_custom_call.1} parent=1 // loop_header
      %s19 = sphi 0, %s23
      %p20 = scmp.ge.s32.totalorder %s19, 4
      %s29 = sphi 0, %s31
      %s32 = sphi 0, %s29
      %s33 = sphi 0, %s32
      %s49 = sphi 0, %s33
      %s53 = sphi 0, %s53
      %s55 = sphi 0, %s53
      %s56 = sphi 0, %s55
      %s70 = sphi 0, %s56
      %s74 = sphi 0, %s74
      %s76 = sphi 0, %s74
      %s77 = sphi 0, %s76
      %s91 = sphi 0, %s77
      %s95 = sphi 0, %s95
      %s97 = sphi 0, %s95
      %s98 = sphi 0, %s97
      %s112 = sphi 0, %s98
      %s116 = sphi 0, %s116
      %s118 = sphi 0, %s116
      %s119 = sphi 0, %s118
      %s133 = sphi 0, %s119
      %s139 = sphi 0, %s141
      %s142 = sphi 0, %s139
      %s143 = sphi 0, %s142
      %s159 = sphi 0, %s143
    $region4: #{tpu_custom_call.1} parent=1 // loop_header_branch
      %22 = sbr.rel (%p20) target = $region8
    $region5: #{tpu_custom_call.1} parent=1 // loop_body
      %s24 = ssub.s32 %s19, 1
      %s25 = ssub.s32 %s19, 2
      %s26 = sadd.s32 %s19, 1
      %s27 = ssub.s32 %s19, %s26
      %p28 = scmp.eq.s32.totalorder %s27, 0
      %s30 = sadd.s32 %s29, 1
      %s31 = scalar_select %p28, %s29, %s30
      %p34 = pneg %p28
      %p35 = scmp.eq.s32.totalorder %s19, 1
      %p36 = por %p34, %p35
      %p37 = scmp.ne.s32.totalorder %s29, %s32
      %p38 = scmp.eq.s32.totalorder %s19, 0
      %p39 = por %p37, %p38
      %p40 = scmp.ne.s32.totalorder %s29, %s32
      %p41 = scmp.eq.s32.totalorder %s24, 1
      %p42 = por %p40, %p41
      %p43 = scmp.ne.s32.totalorder %s32, %s33
      %p44 = scmp.eq.s32.totalorder %s24, 0
      %p45 = por %p43, %p44
      %p46 = scmp.ne.s32.totalorder %s32, %s33
      %p47 = scmp.eq.s32.totalorder %s25, 1
      %p48 = por %p46, %p47
      %p50 = scmp.ne.s32.totalorder %s33, %s49
      %p51 = scmp.eq.s32.totalorder %s25, 0
      %p52 = por %p50, %p51
      %s54 = sadd.s32 %s53, 1
      %p57 = scmp.eq.s32.totalorder %s19, 1
      %p58 = scmp.ne.s32.totalorder %s53, %s55
      %p59 = scmp.eq.s32.totalorder %s19, 0
      %p60 = por %p58, %p59
      %p61 = scmp.ne.s32.totalorder %s53, %s55
      %p62 = scmp.eq.s32.totalorder %s24, 1
      %p63 = por %p61, %p62
      %p64 = scmp.ne.s32.totalorder %s55, %s56
      %p65 = scmp.eq.s32.totalorder %s24, 0
      %p66 = por %p64, %p65
      %p67 = scmp.ne.s32.totalorder %s55, %s56
      %p68 = scmp.eq.s32.totalorder %s25, 1
      %p69 = por %p67, %p68
      %p71 = scmp.ne.s32.totalorder %s56, %s70
      %p72 = scmp.eq.s32.totalorder %s25, 0
      %p73 = por %p71, %p72
      %s75 = sadd.s32 %s74, 1
      %p78 = scmp.eq.s32.totalorder %s19, 1
      %p79 = scmp.ne.s32.totalorder %s74, %s76
      %p80 = scmp.eq.s32.totalorder %s19, 0
      %p81 = por %p79, %p80
      %p82 = scmp.ne.s32.totalorder %s74, %s76
      %p83 = scmp.eq.s32.totalorder %s24, 1
      %p84 = por %p82, %p83
      %p85 = scmp.ne.s32.totalorder %s76, %s77
      %p86 = scmp.eq.s32.totalorder %s24, 0
      %p87 = por %p85, %p86
      %p88 = scmp.ne.s32.totalorder %s76, %s77
      %p89 = scmp.eq.s32.totalorder %s25, 1
      %p90 = por %p88, %p89
      %p92 = scmp.ne.s32.totalorder %s77, %s91
      %p93 = scmp.eq.s32.totalorder %s25, 0
      %p94 = por %p92, %p93
      %s96 = sadd.s32 %s95, 1
      %p99 = scmp.eq.s32.totalorder %s19, 1
      %p100 = scmp.ne.s32.totalorder %s95, %s97
      %p101 = scmp.eq.s32.totalorder %s19, 0
      %p102 = por %p100, %p101
      %p103 = scmp.ne.s32.totalorder %s95, %s97
      %p104 = scmp.eq.s32.totalorder %s24, 1
      %p105 = por %p103, %p104
      %p106 = scmp.ne.s32.totalorder %s97, %s98
      %p107 = scmp.eq.s32.totalorder %s24, 0
      %p108 = por %p106, %p107
      %p109 = scmp.ne.s32.totalorder %s97, %s98
      %p110 = scmp.eq.s32.totalorder %s25, 1
      %p111 = por %p109, %p110
      %p113 = scmp.ne.s32.totalorder %s98, %s112
      %p114 = scmp.eq.s32.totalorder %s25, 0
      %p115 = por %p113, %p114
      %s117 = sadd.s32 %s116, 1
      %p120 = scmp.eq.s32.totalorder %s19, 1
      %p121 = scmp.ne.s32.totalorder %s116, %s118
      %p122 = scmp.eq.s32.totalorder %s19, 0
      %p123 = por %p121, %p122
      %p124 = scmp.ne.s32.totalorder %s116, %s118
      %p125 = scmp.eq.s32.totalorder %s24, 1
      %p126 = por %p124, %p125
      %p127 = scmp.ne.s32.totalorder %s118, %s119
      %p128 = scmp.eq.s32.totalorder %s24, 0
      %p129 = por %p127, %p128
      %p130 = scmp.ne.s32.totalorder %s118, %s119
      %p131 = scmp.eq.s32.totalorder %s25, 1
      %p132 = por %p130, %p131
      %p134 = scmp.ne.s32.totalorder %s119, %s133
      %p135 = scmp.eq.s32.totalorder %s25, 0
      %p136 = por %p134, %p135
      %s137 = ssub.s32 %s19, %s26
      %p138 = scmp.eq.s32.totalorder %s137, 0
      %s140 = sadd.s32 %s139, 1
      %s141 = scalar_select %p138, %s139, %s140
      %p144 = pneg %p138
      %p145 = scmp.eq.s32.totalorder %s19, 1
      %p146 = por %p144, %p145
      %p147 = scmp.ne.s32.totalorder %s139, %s142
      %p148 = scmp.eq.s32.totalorder %s19, 0
      %p149 = por %p147, %p148
      %p150 = scmp.ne.s32.totalorder %s139, %s142
      %p151 = scmp.eq.s32.totalorder %s24, 1
      %p152 = por %p150, %p151
      %p153 = scmp.ne.s32.totalorder %s142, %s143
      %p154 = scmp.eq.s32.totalorder %s24, 0
      %p155 = por %p153, %p154
      %p156 = scmp.ne.s32.totalorder %s142, %s143
      %p157 = scmp.eq.s32.totalorder %s25, 1
      %p158 = por %p156, %p157
      %p160 = scmp.ne.s32.totalorder %s143, %s159
      %p161 = scmp.eq.s32.totalorder %s25, 0
      %p162 = por %p160, %p161
      %p163 = scmp.le.s32.totalorder 1, %s19
      %p164 = scmp.lt.s32.totalorder %s19, 3
      %p165 = pnand %p163, %p164
      %p166 = pneg %p165
      // Predicated region
      $region9: #{tpu_custom_call.1} parent=5 // pred_check
        _
      $region10: #{tpu_custom_call.1} parent=5 // pred_check_branch
        %168 = sbr.rel (%p165) target = $region12
      $region11: #{tpu_custom_call.1} parent=5 // pred_region
        %s169 = ssub.s32 %s19, 1
        // Predicated region
        $region13: #{tpu_custom_call.1} parent=11 // pred_check
          %p170 = pneg %p66
        $region14: #{tpu_custom_call.1} parent=11 // pred_check_branch
          %172 = sbr.rel (%p170) target = $region16
        $region15: #{tpu_custom_call.1} parent=11 // pred_region
          %174 = vsyncadd [#allocation6], 0
          %s175 = sshll.u32 %s1, 4
          %s176 = int_to_ptr.hbm [resolvable:$true] %s175
          %s177 = sshll.u32 [#allocation5], 4
          %s178 = int_to_ptr.vmem [resolvable:$true] %s177
          %183 = dma.hbm_to_vmem [thread:$0]  %s176, 768, %s178, [#allocation6], 64, 64, 4
        $region16: #{tpu_custom_call.1} parent=11 // pred_fallthru
          _
        // Predicated region
        $region17: #{tpu_custom_call.1} parent=11 // pred_check
          %p184 = pneg %p87
        $region18: #{tpu_custom_call.1} parent=11 // pred_check_branch
          %186 = sbr.rel (%p184) target = $region20
        $region19: #{tpu_custom_call.1} parent=11 // pred_region
          %188 = vsyncadd [#allocation6], 0
          %s189 = sshll.u32 %s2, 4
          %s190 = int_to_ptr.hbm [resolvable:$true] %s189
          %s191 = sshll.u32 [#allocation7], 4
          %s192 = int_to_ptr.vmem [resolvable:$true] %s191
          %197 = dma.hbm_to_vmem [thread:$0]  %s190, 256, %s192, [#allocation6], 64, 64, 4
        $region20: #{tpu_custom_call.1} parent=11 // pred_fallthru
          _
        // Predicated region
        $region21: #{tpu_custom_call.1} parent=11 // pred_check
          %p198 = pneg %p108
        $region22: #{tpu_custom_call.1} parent=11 // pred_check_branch
          %200 = sbr.rel (%p198) target = $region24
        $region23: #{tpu_custom_call.1} parent=11 // pred_region
          %202 = vsyncadd [#allocation9], 0
          %s203 = sshll.u32 %s3, 4
          %s204 = int_to_ptr.hbm [resolvable:$true] %s203
          %s205 = sshll.u32 [#allocation8], 4
          %s206 = int_to_ptr.vmem [resolvable:$true] %s205
          %211 = dma.hbm_to_vmem [thread:$0]  %s204, 256, %s206, [#allocation9], 64, 64, 4
        $region24: #{tpu_custom_call.1} parent=11 // pred_fallthru
          _
        // Predicated region
        $region25: #{tpu_custom_call.1} parent=11 // pred_check
          %p212 = pneg %p129
        $region26: #{tpu_custom_call.1} parent=11 // pred_check_branch
          %214 = sbr.rel (%p212) target = $region28
        $region27: #{tpu_custom_call.1} parent=11 // pred_region
          %216 = vsyncadd [#allocation9], 0
          %s217 = sshll.u32 %s4, 4
          %s218 = int_to_ptr.hbm [resolvable:$true] %s217
          %s219 = sshll.u32 [#allocation10], 4
          %s220 = int_to_ptr.vmem [resolvable:$true] %s219
          %225 = dma.hbm_to_vmem [thread:$0]  %s218, 256, %s220, [#allocation9], 128, 128, 8
        $region28: #{tpu_custom_call.1} parent=11 // pred_fallthru
          _
      $region12: #{tpu_custom_call.1} parent=5 // pred_fallthru
        _
      %p226 = scmp.lt.s32.totalorder %s19, 2
      // Predicated region
      $region29: #{tpu_custom_call.1} parent=5 // pred_check
        %p227 = pneg %p226
      $region30: #{tpu_custom_call.1} parent=5 // pred_check_branch
        %229 = sbr.rel (%p227) target = $region32
      $region31: #{tpu_custom_call.1} parent=5 // pred_region
        // Predicated region
        $region33: #{tpu_custom_call.1} parent=31 // pred_check
          %p230 = pneg %p39
        $region34: #{tpu_custom_call.1} parent=31 // pred_check_branch
          %232 = sbr.rel (%p230) target = $region36
        $region35: #{tpu_custom_call.1} parent=31 // pred_region
          %s233 = sand.u32 %s29, 1
          %s234 = scalar_lea.sflag [#allocation3], %s233
          %s235 = sand.u32 %s29, 1
          %s236 = smul.addr %s235, 8
          %s237 = scalar_lea.vmem [#allocation2], %s236
          %239 = vsyncadd %s234, 0
          %s240 = smul.addr %s19, 8
          %s241 = scalar_lea.hbm %s0, %s240
          %s243 = sshll.u32 %s241, 4
          %s244 = int_to_ptr.hbm [resolvable:$true] %s243
          %s245 = sshll.u32 %s237, 4
          %s246 = int_to_ptr.vmem [resolvable:$true] %s245
          %248 = dma.hbm_to_vmem [thread:$0]  %s244, 128, %s246, %s234
        $region36: #{tpu_custom_call.1} parent=31 // pred_fallthru
          _
      $region32: #{tpu_custom_call.1} parent=5 // pred_fallthru
        _
      %p249 = scmp.le.s32.totalorder 1, %s19
      %p250 = scmp.lt.s32.totalorder %s19, 3
      %p251 = pnand %p249, %p250
      %p252 = pneg %p251
      // Predicated region
      $region37: #{tpu_custom_call.1} parent=5 // pred_check
        _
      $region38: #{tpu_custom_call.1} parent=5 // pred_check_branch
        %254 = sbr.rel (%p251) target = $region40
      $region39: #{tpu_custom_call.1} parent=5 // pred_region
        %s255 = ssub.s32 %s19, 1
        %s256 = sand.u32 %s32, 1
        %s257 = scalar_lea.sflag [#allocation3], %s256
        %s258 = sand.u32 %s32, 1
        %s259 = smul.addr %s258, 8
        %s260 = scalar_lea.vmem [#allocation2], %s259
        // Predicated region
        $region41: #{tpu_custom_call.1} parent=39 // pred_check
          %p261 = pneg %p45
        $region42: #{tpu_custom_call.1} parent=39 // pred_check_branch
          %263 = sbr.rel (%p261) target = $region44
        $region43: #{tpu_custom_call.1} parent=39 // pred_region
          %265 = dma.done %s257, 128
        $region44: #{tpu_custom_call.1} parent=39 // pred_fallthru
          _
        // Predicated region
        $region45: #{tpu_custom_call.1} parent=39 // pred_check
          %p266 = pneg %p66
        $region46: #{tpu_custom_call.1} parent=39 // pred_check_branch
          %268 = sbr.rel (%p266) target = $region48
        $region47: #{tpu_custom_call.1} parent=39 // pred_region
          %270 = dma.done [#allocation6], 768
        $region48: #{tpu_custom_call.1} parent=39 // pred_fallthru
          _
        // Predicated region
        $region49: #{tpu_custom_call.1} parent=39 // pred_check
          %p271 = pneg %p87
        $region50: #{tpu_custom_call.1} parent=39 // pred_check_branch
          %273 = sbr.rel (%p271) target = $region52
        $region51: #{tpu_custom_call.1} parent=39 // pred_region
          %275 = dma.done [#allocation6], 256
        $region52: #{tpu_custom_call.1} parent=39 // pred_fallthru
          _
        // Predicated region
        $region53: #{tpu_custom_call.1} parent=39 // pred_check
          %p276 = pneg %p108
        $region54: #{tpu_custom_call.1} parent=39 // pred_check_branch
          %278 = sbr.rel (%p276) target = $region56
        $region55: #{tpu_custom_call.1} parent=39 // pred_region
          %280 = dma.done [#allocation9], 256
        $region56: #{tpu_custom_call.1} parent=39 // pred_fallthru
          _
        // Predicated region
        $region57: #{tpu_custom_call.1} parent=39 // pred_check
          %p281 = pneg %p129
        $region58: #{tpu_custom_call.1} parent=39 // pred_check_branch
          %283 = sbr.rel (%p281) target = $region60
        $region59: #{tpu_custom_call.1} parent=39 // pred_region
          %285 = dma.done [#allocation9], 256
        $region60: #{tpu_custom_call.1} parent=39 // pred_fallthru
          _
        %s286 = sand.u32 %s32, 1
        %s287 = scalar_lea.sflag [#allocation3], %s286
        %s288 = sand.u32 %s32, 1
        %s289 = smul.addr %s288, 8
        %s290 = scalar_lea.vmem [#allocation2], %s289
        %p291 = pneg %p45
        %p292 = pneg %p42
        %p293 = pneg %p66
        %p294 = pneg %p63
        %p295 = pneg %p87
        %p296 = pneg %p84
        %p297 = pneg %p108
        %p298 = pneg %p105
        %p299 = pneg %p129
        %p300 = pneg %p126
        %p301 = pneg %p155
        %p302 = pneg %p152
        %s303 = sand.u32 %s142, 1
        %s304 = scalar_lea.sflag [#allocation4], %s303
        %s305 = sand.u32 %s142, 1
        %s306 = smul.addr %s305, 8
        %s307 = scalar_lea.vmem [#allocation11], %s306
        %v309 = vld [vmem:[%s260] sm:$0xff]
        %v310 = vpack.c.bf16 %v309, %v309
        %v311 = vld [vmem:[#allocation5] sm:$0xf]
        %v312 = vld [vmem:[#allocation5 + $0x4] sm:$0xf]
        %v313 = vld [vmem:[#allocation5 + $0x8] sm:$0xf]
        %v314 = vld [vmem:[#allocation5 + $0xc] sm:$0xf]
        %v315 = vld [vmem:[#allocation10] sm:$0x1]
        %v316 = vperm.slane %v315, 0
        %v321 = vunpack.c.l.b16 %v311
        %v322 = vunpack.c.l.b16 %v312
        %v323 = vunpack.c.l.b16 %v313
        %v324 = vunpack.c.l.b16 %v314
        %v325 = vpack.c.b16 %v322, %v321
        %v326 = vpack.c.b16 %v324, %v323
        %vm329 = vcmask 261120
        %v331 = vsel %vm329, %v310, 0
        %333 = vmatpush.bf16.msra.mxu0 0
        %334 = vmatpush.bf16.msra.mxu0 0
        %335 = vmatpush.bf16.msra.mxu0 0
        %336 = vmatpush.bf16.msra.mxu0 0
        %337 = vmatpush.bf16.msra.mxu0 0
        %338 = vmatpush.bf16.msra.mxu0 0
        %339 = vmatpush.bf16.msra.mxu0 %v326
        %340 = vmatpush.bf16.msra.mxu0 %v325
        %341 = vmatmul.bf16.gmra.mxu0 %v331
        %v342 = vpop.f32.mrf.mxu0
        %v343 = vadd.f32 %v316, %v342
        %v344 = vpop.f32.mrf.mxu0
        %345 = vdwg.mxu0
        %v346 = vpack.c.bf16 %v343, %v343
        %s347 = scalar_lea.vmem [#allocation5], 16
        %v348 = vld [vmem:[%s347] sm:$0xf]
        %v349 = vld [vmem:[%s347 + $0x4] sm:$0xf]
        %v350 = vld [vmem:[%s347 + $0x8] sm:$0xf]
        %v351 = vld [vmem:[%s347 + $0xc] sm:$0xf]
        %v352 = vld [vmem:[#allocation10 + $0x1] sm:$0x1]
        %v353 = vperm.slane %v352, 0
        %v358 = vunpack.c.l.b16 %v348
        %v359 = vunpack.c.l.b16 %v349
        %v360 = vunpack.c.l.b16 %v350
        %v361 = vunpack.c.l.b16 %v351
        %v362 = vpack.c.b16 %v359, %v358
        %v363 = vpack.c.b16 %v361, %v360
        %366 = vmatpush.bf16.msra.mxu0 0
        %367 = vmatpush.bf16.msra.mxu0 0
        %368 = vmatpush.bf16.msra.mxu0 0
        %369 = vmatpush.bf16.msra.mxu0 0
        %370 = vmatpush.bf16.msra.mxu0 0
        %371 = vmatpush.bf16.msra.mxu0 0
        %372 = vmatpush.bf16.msra.mxu0 %v363
        %373 = vmatpush.bf16.msra.mxu0 %v362
        %374 = vmatmul.bf16.gmra.mxu0 %v331
        %v375 = vpop.f32.mrf.mxu0
        %v376 = vadd.f32 %v353, %v375
        %v377 = vpop.f32.mrf.mxu0
        %378 = vdwg.mxu0
        %v379 = vpack.c.bf16 %v376, %v376
        %s380 = scalar_lea.vmem [#allocation5], 32
        %v381 = vld [vmem:[%s380] sm:$0xf]
        %v382 = vld [vmem:[%s380 + $0x4] sm:$0xf]
        %v383 = vld [vmem:[%s380 + $0x8] sm:$0xf]
        %v384 = vld [vmem:[%s380 + $0xc] sm:$0xf]
        %v385 = vld [vmem:[#allocation10 + $0x2] sm:$0x1]
        %v386 = vperm.slane %v385, 0
        %v391 = vunpack.c.l.b16 %v381
        %v392 = vunpack.c.l.b16 %v382
        %v393 = vunpack.c.l.b16 %v383
        %v394 = vunpack.c.l.b16 %v384
        %v395 = vpack.c.b16 %v392, %v391
        %v396 = vpack.c.b16 %v394, %v393
        %399 = vmatpush.bf16.msra.mxu0 0
        %400 = vmatpush.bf16.msra.mxu0 0
        %401 = vmatpush.bf16.msra.mxu0 0
        %402 = vmatpush.bf16.msra.mxu0 0
        %403 = vmatpush.bf16.msra.mxu0 0
        %404 = vmatpush.bf16.msra.mxu0 0
        %405 = vmatpush.bf16.msra.mxu0 %v396
        %406 = vmatpush.bf16.msra.mxu0 %v395
        %407 = vmatmul.bf16.gmra.mxu0 %v331
        %v408 = vpop.f32.mrf.mxu0
        %v409 = vadd.f32 %v386, %v408
        %v410 = vpop.f32.mrf.mxu0
        %411 = vdwg.mxu0
        %v412 = vpack.c.bf16 %v409, %v409
        %vm413 = vcmask 64512
        %v415 = vsel %vm413, %v346, 0
        %v418 = vsel %vm413, %v379, 0
        %420 = vmatpush.bf16.xpose.msra.mxu0 0
        %421 = vmatpush.bf16.xpose.msra.mxu0 0
        %422 = vmatpush.bf16.xpose.msra.mxu0 0
        %423 = vmatpush.bf16.xpose.msra.mxu0 0
        %424 = vmatpush.bf16.xpose.msra.mxu0 0
        %425 = vmatpush.bf16.xpose.msra.mxu0 0
        %426 = vmatpush.bf16.xpose.msra.mxu0 0
        %427 = vmatpush.bf16.xpose.msra.mxu0 %v418
        %428 = vmatmul.bf16.gmra.mxu0 %v415
        %v429 = vpop.f32.mrf.mxu0
        %v430 = vadd.f32 0.0, %v429
        %v431 = vpop.f32.mrf.mxu0
        %432 = vdwg.mxu0
        %v433 = vsel %vm413, %v430, -inf
        %434 = vmax.xlane.f32.xlu0 %v433
        %v435 = vpop.xlane.xlu0 %434
        %v436 = vsub.f32 %v430, %v435
        %v437 = vmul.f32 %v436, 1.442695
        %v438 = vpow.pop %v437
        %v439 = vsel %vm413, %v438, 0.0
        %440 = vadd.xlane.f32.xlu0 %v439
        %v441 = vpop.xlane.xlu0 %440
        %v442 = vrcp.pop %v441
        %v443 = vmul.f32 %v438, %v442
        %v444 = vpack.c.bf16 %v443, %v443
        %v446 = vsel %vm413, %v444, 0
        %vm448 = vcmask 1043456
        %v450 = vsel %vm448, %v412, 0
        %452 = vmatpush.bf16.msra.mxu0 0
        %453 = vmatpush.bf16.msra.mxu0 0
        %454 = vmatpush.bf16.msra.mxu0 0
        %455 = vmatpush.bf16.msra.mxu0 0
        %456 = vmatpush.bf16.msra.mxu0 0
        %457 = vmatpush.bf16.msra.mxu0 0
        %458 = vmatpush.bf16.msra.mxu0 0
        %459 = vmatpush.bf16.msra.mxu0 %v450
        %460 = vmatmul.bf16.gmra.mxu0 %v446
        %v461 = vpop.f32.mrf.mxu0
        %v462 = vadd.f32 0.0, %v461
        %v463 = vpop.f32.mrf.mxu0
        %464 = vdwg.mxu0
        %v465 = vpack.c.bf16 %v462, %v462
        %v466 = vld [vmem:[#allocation7] sm:$0xf]
        %v468 = vunpack.c.l.b16 %v346
        %v469 = vpack.c.b16 %v468, %v468
        %470 = vrot.lane.b32.xlu0 %v469, 120
        %v471 = vpop.permute.xlu0 %470
        %v473 = vunpack.c.l.b16 %v379
        %v474 = vpack.c.b16 %v473, %v473
        %475 = vrot.lane.b32.xlu0 %v474, 120
        %v476 = vpop.permute.xlu0 %475
        %v478 = vsel %vm413, %v471, 0
        %v481 = vsel %vm413, %v476, 0
        %483 = vmatpush.bf16.xpose.msra.mxu0 0
        %484 = vmatpush.bf16.xpose.msra.mxu0 0
        %485 = vmatpush.bf16.xpose.msra.mxu0 0
        %486 = vmatpush.bf16.xpose.msra.mxu0 0
        %487 = vmatpush.bf16.xpose.msra.mxu0 0
        %488 = vmatpush.bf16.xpose.msra.mxu0 0
        %489 = vmatpush.bf16.xpose.msra.mxu0 0
        %490 = vmatpush.bf16.xpose.msra.mxu0 %v481
        %491 = vmatmul.bf16.gmra.mxu0 %v478
        %v492 = vpop.f32.mrf.mxu0
        %v493 = vadd.f32 0.0, %v492
        %v494 = vpop.f32.mrf.mxu0
        %495 = vdwg.mxu0
        %v496 = vsel %vm413, %v493, -inf
        %497 = vmax.xlane.f32.xlu0 %v496
        %v498 = vpop.xlane.xlu0 %497
        %v499 = vsub.f32 %v493, %v498
        %v500 = vmul.f32 %v499, 1.442695
        %v501 = vpow.pop %v500
        %v502 = vsel %vm413, %v501, 0.0
        %503 = vadd.xlane.f32.xlu0 %v502
        %v504 = vpop.xlane.xlu0 %503
        %v505 = vrcp.pop %v504
        %v506 = vmul.f32 %v501, %v505
        %v507 = vpack.c.bf16 %v506, %v506
        %v509 = vunpack.c.l.b16 %v412
        %v510 = vpack.c.b16 %v509, %v509
        %511 = vrot.lane.b32.xlu0 %v510, 120
        %v512 = vpop.permute.xlu0 %511
        %v514 = vsel %vm413, %v507, 0
        %v517 = vsel %vm448, %v512, 0
        %519 = vmatpush.bf16.msra.mxu0 0
        %520 = vmatpush.bf16.msra.mxu0 0
        %521 = vmatpush.bf16.msra.mxu0 0
        %522 = vmatpush.bf16.msra.mxu0 0
        %523 = vmatpush.bf16.msra.mxu0 0
        %524 = vmatpush.bf16.msra.mxu0 0
        %525 = vmatpush.bf16.msra.mxu0 0
        %526 = vmatpush.bf16.msra.mxu0 %v517
        %527 = vmatmul.bf16.gmra.mxu0 %v514
        %v528 = vpop.f32.mrf.mxu0
        %v529 = vadd.f32 0.0, %v528
        %v530 = vpop.f32.mrf.mxu0
        %531 = vdwg.mxu0
        %v532 = vpack.c.bf16 %v529, %v529
        %v533 = vld [vmem:[#allocation7 + $0x4] sm:$0xf]
        %v535 = vsel %vm413, %v532, 0
        %v538 = vsel %vm448, %v533, 0
        %540 = vmatpush.bf16.msra.mxu0 0
        %541 = vmatpush.bf16.msra.mxu0 0
        %542 = vmatpush.bf16.msra.mxu0 0
        %543 = vmatpush.bf16.msra.mxu0 0
        %544 = vmatpush.bf16.msra.mxu0 0
        %545 = vmatpush.bf16.msra.mxu0 0
        %546 = vmatpush.bf16.msra.mxu0 0
        %547 = vmatpush.bf16.msra.mxu0 %v538
        %548 = vmatmul.bf16.gmra.mxu0 %v535
        %v549 = vpop.f32.mrf.mxu0
        %v550 = vadd.f32 0.0, %v549
        %v551 = vpop.f32.mrf.mxu0
        %552 = vdwg.mxu0
        %v554 = vsel %vm413, %v465, 0
        %v557 = vsel %vm448, %v466, 0
        %559 = vmatpush.bf16.msra.mxu0 0
        %560 = vmatpush.bf16.msra.mxu0 0
        %561 = vmatpush.bf16.msra.mxu0 0
        %562 = vmatpush.bf16.msra.mxu0 0
        %563 = vmatpush.bf16.msra.mxu0 0
        %564 = vmatpush.bf16.msra.mxu0 0
        %565 = vmatpush.bf16.msra.mxu0 0
        %566 = vmatpush.bf16.msra.mxu0 %v557
        %567 = vmatmul.bf16.gmra.mxu0 %v554
        %v568 = vpop.f32.mrf.mxu0
        %v569 = vadd.f32 %v550, %v568
        %v570 = vpop.f32.mrf.mxu0
        %571 = vdwg.mxu0
        %572 = vrot.lane.b32.xlu0 %v469, 112
        %v573 = vpop.permute.xlu0 %572
        %574 = vrot.lane.b32.xlu0 %v474, 112
        %v575 = vpop.permute.xlu0 %574
        %v577 = vsel %vm413, %v573, 0
        %v580 = vsel %vm413, %v575, 0
        %582 = vmatpush.bf16.xpose.msra.mxu0 0
        %583 = vmatpush.bf16.xpose.msra.mxu0 0
        %584 = vmatpush.bf16.xpose.msra.mxu0 0
        %585 = vmatpush.bf16.xpose.msra.mxu0 0
        %586 = vmatpush.bf16.xpose.msra.mxu0 0
        %587 = vmatpush.bf16.xpose.msra.mxu0 0
        %588 = vmatpush.bf16.xpose.msra.mxu0 0
        %589 = vmatpush.bf16.xpose.msra.mxu0 %v580
        %590 = vmatmul.bf16.gmra.mxu0 %v577
        %v591 = vpop.f32.mrf.mxu0
        %v592 = vadd.f32 0.0, %v591
        %v593 = vpop.f32.mrf.mxu0
        %594 = vdwg.mxu0
        %v595 = vsel %vm413, %v592, -inf
        %596 = vmax.xlane.f32.xlu0 %v595
        %v597 = vpop.xlane.xlu0 %596
        %v598 = vsub.f32 %v592, %v597
        %v599 = vmul.f32 %v598, 1.442695
        %v600 = vpow.pop %v599
        %v601 = vsel %vm413, %v600, 0.0
        %602 = vadd.xlane.f32.xlu0 %v601
        %v603 = vpop.xlane.xlu0 %602
        %v604 = vrcp.pop %v603
        %v605 = vmul.f32 %v600, %v604
        %v606 = vpack.c.bf16 %v605, %v605
        %607 = vrot.lane.b32.xlu0 %v510, 112
        %v608 = vpop.permute.xlu0 %607
        %v610 = vsel %vm413, %v606, 0
        %v613 = vsel %vm448, %v608, 0
        %615 = vmatpush.bf16.msra.mxu0 0
        %616 = vmatpush.bf16.msra.mxu0 0
        %617 = vmatpush.bf16.msra.mxu0 0
        %618 = vmatpush.bf16.msra.mxu0 0
        %619 = vmatpush.bf16.msra.mxu0 0
        %620 = vmatpush.bf16.msra.mxu0 0
        %621 = vmatpush.bf16.msra.mxu0 0
        %622 = vmatpush.bf16.msra.mxu0 %v613
        %623 = vmatmul.bf16.gmra.mxu0 %v610
        %v624 = vpop.f32.mrf.mxu0
        %v625 = vadd.f32 0.0, %v624
        %v626 = vpop.f32.mrf.mxu0
        %627 = vdwg.mxu0
        %v628 = vpack.c.bf16 %v625, %v625
        %v629 = vld [vmem:[#allocation7 + $0x8] sm:$0xf]
        %v631 = vsel %vm413, %v628, 0
        %v634 = vsel %vm448, %v629, 0
        %636 = vmatpush.bf16.msra.mxu0 0
        %637 = vmatpush.bf16.msra.mxu0 0
        %638 = vmatpush.bf16.msra.mxu0 0
        %639 = vmatpush.bf16.msra.mxu0 0
        %640 = vmatpush.bf16.msra.mxu0 0
        %641 = vmatpush.bf16.msra.mxu0 0
        %642 = vmatpush.bf16.msra.mxu0 0
        %643 = vmatpush.bf16.msra.mxu0 %v634
        %644 = vmatmul.bf16.gmra.mxu0 %v631
        %v645 = vpop.f32.mrf.mxu0
        %v646 = vadd.f32 0.0, %v645
        %v647 = vpop.f32.mrf.mxu0
        %648 = vdwg.mxu0
        %v649 = vadd.f32 %v569, %v646
        %650 = vrot.lane.b32.xlu0 %v469, 104
        %v651 = vpop.permute.xlu0 %650
        %652 = vrot.lane.b32.xlu0 %v474, 104
        %v653 = vpop.permute.xlu0 %652
        %v655 = vsel %vm413, %v651, 0
        %v658 = vsel %vm413, %v653, 0
        %660 = vmatpush.bf16.xpose.msra.mxu0 0
        %661 = vmatpush.bf16.xpose.msra.mxu0 0
        %662 = vmatpush.bf16.xpose.msra.mxu0 0
        %663 = vmatpush.bf16.xpose.msra.mxu0 0
        %664 = vmatpush.bf16.xpose.msra.mxu0 0
        %665 = vmatpush.bf16.xpose.msra.mxu0 0
        %666 = vmatpush.bf16.xpose.msra.mxu0 0
        %667 = vmatpush.bf16.xpose.msra.mxu0 %v658
        %668 = vmatmul.bf16.gmra.mxu0 %v655
        %v669 = vpop.f32.mrf.mxu0
        %v670 = vadd.f32 0.0, %v669
        %v671 = vpop.f32.mrf.mxu0
        %672 = vdwg.mxu0
        %v673 = vsel %vm413, %v670, -inf
        %674 = vmax.xlane.f32.xlu0 %v673
        %v675 = vpop.xlane.xlu0 %674
        %v676 = vsub.f32 %v670, %v675
        %v677 = vmul.f32 %v676, 1.442695
        %v678 = vpow.pop %v677
        %v679 = vsel %vm413, %v678, 0.0
        %680 = vadd.xlane.f32.xlu0 %v679
        %v681 = vpop.xlane.xlu0 %680
        %v682 = vrcp.pop %v681
        %v683 = vmul.f32 %v678, %v682
        %v684 = vpack.c.bf16 %v683, %v683
        %685 = vrot.lane.b32.xlu0 %v510, 104
        %v686 = vpop.permute.xlu0 %685
        %v688 = vsel %vm413, %v684, 0
        %v691 = vsel %vm448, %v686, 0
        %693 = vmatpush.bf16.msra.mxu0 0
        %694 = vmatpush.bf16.msra.mxu0 0
        %695 = vmatpush.bf16.msra.mxu0 0
        %696 = vmatpush.bf16.msra.mxu0 0
        %697 = vmatpush.bf16.msra.mxu0 0
        %698 = vmatpush.bf16.msra.mxu0 0
        %699 = vmatpush.bf16.msra.mxu0 0
        %700 = vmatpush.bf16.msra.mxu0 %v691
        %701 = vmatmul.bf16.gmra.mxu0 %v688
        %v702 = vpop.f32.mrf.mxu0
        %v703 = vadd.f32 0.0, %v702
        %v704 = vpop.f32.mrf.mxu0
        %705 = vdwg.mxu0
        %v706 = vpack.c.bf16 %v703, %v703
        %v707 = vld [vmem:[#allocation7 + $0xc] sm:$0xf]
        %v709 = vsel %vm413, %v706, 0
        %v712 = vsel %vm448, %v707, 0
        %714 = vmatpush.bf16.msra.mxu0 0
        %715 = vmatpush.bf16.msra.mxu0 0
        %716 = vmatpush.bf16.msra.mxu0 0
        %717 = vmatpush.bf16.msra.mxu0 0
        %718 = vmatpush.bf16.msra.mxu0 0
        %719 = vmatpush.bf16.msra.mxu0 0
        %720 = vmatpush.bf16.msra.mxu0 0
        %721 = vmatpush.bf16.msra.mxu0 %v712
        %722 = vmatmul.bf16.gmra.mxu0 %v709
        %v723 = vpop.f32.mrf.mxu0
        %v724 = vadd.f32 0.0, %v723
        %v725 = vpop.f32.mrf.mxu0
        %726 = vdwg.mxu0
        %v727 = vadd.f32 %v649, %v724
        %v728 = vld [vmem:[#allocation10 + $0x3] sm:$0x1]
        %v729 = vperm.slane %v728, 0
        %v730 = vadd.f32 %v727, %v729
        %v731 = vadd.f32 %v309, %v730
        %v732 = vld [vmem:[#allocation10 + $0x4] sm:$0x1]
        %v733 = vld [vmem:[#allocation10 + $0x5] sm:$0x1]
        %v734 = vsel %vm329, %v731, 0.0
        %735 = vadd.xlane.f32.xlu0 %v734
        %v736 = vpop.xlane.xlu0 %735
        %v737 = vrcp.pop 32.0
        %v738 = vmul.f32 32.0, %v737
        %v739 = vsub.f32 1.0, %v738
        %v740 = vmul.f32 %v737, %v739
        %v741 = vadd.f32 %v737, %v740
        %vm742 = vweird.f32 %v737
        %v743 = vsel %vm742, %v737, %v741
        %v744 = vmul.f32 %v736, %v743
        %v745 = vsub.f32 %v731, %v744
        %v746 = vmul.f32 %v745, %v745
        %v747 = vsel %vm329, %v746, 0.0
        %748 = vadd.xlane.f32.xlu0 %v747
        %v749 = vpop.xlane.xlu0 %748
        %v750 = vrcp.pop 31.0
        %v751 = vmul.f32 31.0, %v750
        %v752 = vsub.f32 1.0, %v751
        %v753 = vmul.f32 %v750, %v752
        %v754 = vadd.f32 %v750, %v753
        %vm755 = vweird.f32 %v750
        %v756 = vsel %vm755, %v750, %v754
        %v757 = vmul.f32 %v749, %v756
        %v758 = vperm.slane %v732, 0
        %v759 = vmul.f32 %v745, %v758
        %v760 = vadd.f32 %v757, 1e-12
        %v761 = vrsqrt.pop %v760
        %v762 = vmul.f32 %v761, %v760
        %v763 = vmul.f32 %v762, %v761
        %v764 = vmul.f32 0.5, %v763
        %v765 = vsub.f32 1.5, %v764
        %v766 = vmul.f32 %v761, %v765
        %vm767 = vweird.f32 %v760
        %vm768 = vweird.f32 %v761
        %vm769 = vmor %vm767, %vm768
        %v770 = vsel %vm769, %v761, %v766
        %v771 = vmul.f32 %v759, %v770
        %v772 = vperm.slane %v733, 0
        %v773 = vadd.f32 %v771, %v772
        %v774 = vpack.c.bf16 %v773, %v773
        %v775 = vld [vmem:[#allocation8] sm:$0xf]
        %v776 = vld [vmem:[#allocation8 + $0x4] sm:$0xf]
        %v777 = vld [vmem:[#allocation8 + $0x8] sm:$0xf]
        %v778 = vld [vmem:[#allocation8 + $0xc] sm:$0xf]
        %v779 = vld [vmem:[#allocation10 + $0x6] sm:$0x1]
        %v780 = vperm.slane %v779, 0
        %v785 = vunpack.c.l.b16 %v775
        %v786 = vunpack.c.l.b16 %v776
        %v787 = vunpack.c.l.b16 %v777
        %v788 = vunpack.c.l.b16 %v778
        %v789 = vpack.c.b16 %v786, %v785
        %v790 = vpack.c.b16 %v788, %v787
        %v794 = vsel %vm329, %v774, 0
        %796 = vmatpush.bf16.msra.mxu0 0
        %797 = vmatpush.bf16.msra.mxu0 0
        %798 = vmatpush.bf16.msra.mxu0 0
        %799 = vmatpush.bf16.msra.mxu0 0
        %800 = vmatpush.bf16.msra.mxu0 0
        %801 = vmatpush.bf16.msra.mxu0 0
        %802 = vmatpush.bf16.msra.mxu0 %v790
        %803 = vmatpush.bf16.msra.mxu0 %v789
        %804 = vmatmul.bf16.gmra.mxu0 %v794
        %v805 = vpop.f32.mrf.mxu0
        %v806 = vadd.f32 %v780, %v805
        %v807 = vpop.f32.mrf.mxu0
        %808 = vdwg.mxu0
        %v809 = vadd.f32 %v773, %v806
        %v810 = vld [vmem:[#allocation10 + $0x7] sm:$0x1]
        %v811 = vld [vmem:[#allocation10 + $0x8] sm:$0x1]
        %v812 = vsel %vm329, %v809, 0.0
        %813 = vadd.xlane.f32.xlu0 %v812
        %v814 = vpop.xlane.xlu0 %813
        %v815 = vmul.f32 %v814, %v743
        %v816 = vsub.f32 %v809, %v815
        %v817 = vmul.f32 %v816, %v816
        %v818 = vsel %vm329, %v817, 0.0
        %819 = vadd.xlane.f32.xlu0 %v818
        %v820 = vpop.xlane.xlu0 %819
        %v821 = vmul.f32 %v820, %v756
        %v822 = vperm.slane %v810, 0
        %v823 = vmul.f32 %v816, %v822
        %v824 = vadd.f32 %v821, 1e-12
        %v825 = vrsqrt.pop %v824
        %v826 = vmul.f32 %v825, %v824
        %v827 = vmul.f32 %v826, %v825
        %v828 = vmul.f32 0.5, %v827
        %v829 = vsub.f32 1.5, %v828
        %v830 = vmul.f32 %v825, %v829
        %vm831 = vweird.f32 %v824
        %vm832 = vweird.f32 %v825
        %vm833 = vmor %vm831, %vm832
        %v834 = vsel %vm833, %v825, %v830
        %v835 = vmul.f32 %v823, %v834
        %v836 = vperm.slane %v811, 0
        %v837 = vadd.f32 %v835, %v836
        %838 = vst.msk [vmem:[%s307] sm:$0xff] %vm329, %v837
        %s839 = sand.u32 %s142, 1
        %s840 = scalar_lea.sflag [#allocation4], %s839
        %s841 = sand.u32 %s142, 1
        %s842 = smul.addr %s841, 8
        %s843 = scalar_lea.vmem [#allocation11], %s842
        // Predicated region
        $region61: #{tpu_custom_call.1} parent=39 // pred_check
          %p844 = pneg %p152
        $region62: #{tpu_custom_call.1} parent=39 // pred_check_branch
          %846 = sbr.rel (%p844) target = $region64
        $region63: #{tpu_custom_call.1} parent=39 // pred_region
          %848 = vsyncadd %s840, 0
          %s849 = smul.addr %s24, 8
          %s850 = scalar_lea.hbm %s5, %s849
          %s852 = sshll.u32 %s843, 4
          %s853 = int_to_ptr.vmem [resolvable:$true] %s852
          %s854 = sshll.u32 %s850, 4
          %s855 = int_to_ptr.hbm [resolvable:$true] %s854
          %857 = dma.vmem_to_hbm [thread:$0]  %s853, 128, %s855, %s840
        $region64: #{tpu_custom_call.1} parent=39 // pred_fallthru
          _
      $region40: #{tpu_custom_call.1} parent=5 // pred_fallthru
        _
      %p858 = scmp.le.s32.totalorder 2, %s19
      // Predicated region
      $region65: #{tpu_custom_call.1} parent=5 // pred_check
        %p859 = pneg %p858
      $region66: #{tpu_custom_call.1} parent=5 // pred_check_branch
        %861 = sbr.rel (%p859) target = $region68
      $region67: #{tpu_custom_call.1} parent=5 // pred_region
        %s862 = ssub.s32 %s19, 2
        // Predicated region
        $region69: #{tpu_custom_call.1} parent=67 // pred_check
          %p863 = pneg %p158
        $region70: #{tpu_custom_call.1} parent=67 // pred_check_branch
          %865 = sbr.rel (%p863) target = $region72
        $region71: #{tpu_custom_call.1} parent=67 // pred_region
          %s866 = sand.u32 %s143, 1
          %s867 = scalar_lea.sflag [#allocation4], %s866
          %s868 = sand.u32 %s143, 1
          %s869 = smul.addr %s868, 8
          %s870 = scalar_lea.vmem [#allocation11], %s869
          %872 = dma.done %s867, 128
        $region72: #{tpu_custom_call.1} parent=67 // pred_fallthru
          _
      $region68: #{tpu_custom_call.1} parent=5 // pred_fallthru
        _
    $region6: #{tpu_custom_call.1} parent=1 // loop_footer
      %s23 = sadd.s32 1, %s19
    $region7: #{tpu_custom_call.1} parent=1 // loop_footer_branch
      %18 = sbr.rel target = $region3
    $region8: #{tpu_custom_call.1} parent=1 // loop_exit
      _
    %873 = vsyncpa [#allocation3], 1
    %s874 = scalar_lea.sflag [#allocation3], 1
    %875 = vsyncpa %s874, 1
    %876 = vsyncpa [#allocation6], 1
    %877 = vsyncpa [#allocation9], 1
    %878 = vsyncpa [#allocation4], 1
    %s879 = scalar_lea.sflag [#allocation4], 1
    %880 = vsyncpa %s879, 1

</llo_original>
